<compile_context>
chip_gen: v7x
topology: tpu7x:2x2x1
jax: 0.10.0
libtpu: 0.0.40
codegen_flags: <defaults>
</compile_context>

<pallas_src>
import jax
import jax.numpy as jnp
from jax.experimental import pallas as pl
from jax.experimental.pallas import tpu as pltpu


def _round_up(a: int, b: int) -> int:
    return (a + b - 1) // b * b


# Below this batch size the fixed cost (relayout pass + kernel launch) dwarfs
# the useful work; a fused XLA elementwise is far faster (perf-review item).
_PALLAS_MIN_BATCH = 1 << 17


def _forward_xla(x, w1, w2):
    """Fused XLA path — exactly the PyTorch expression (natural promotion)."""
    w1 = jnp.asarray(w1).reshape(())
    w2 = jnp.asarray(w2).reshape(())
    return w1 * x[:, 0:1] + w2 * x[:, 1:2]


def _linear_kernel(w_ref, x_ref, o_ref):
    # w_ref : SMEM f32 (2,)                  -- scalar-prefetched weights
    # x_ref : VMEM (2, block_rows, lanes)    -- x[:, 0] plane / x[:, 1] plane
    # o_ref : VMEM (block_rows, lanes)
    w1 = w_ref[0]
    w2 = w_ref[1]
    x0 = x_ref[0].astype(jnp.float32)        # lane-dense vregs
    x1 = x_ref[1].astype(jnp.float32)
    o_ref[...] = (w1 * x0 + w2 * x1).astype(o_ref.dtype)


def linear_model(x, w1, w2, *, block_rows=1024, lanes=512, force_pallas=None):
    """x: (B, F) with F >= 2.  Returns (B, 1) in the promoted dtype."""
    B, F = x.shape
    assert F >= 2, "forward indexes x[:, 0] and x[:, 1]"

    w1a = jnp.asarray(w1)
    w2a = jnp.asarray(w2)
    # PyTorch type promotion: e.g. f32 params * bf16 input -> f32 output.
    out_dtype = jnp.result_type(x.dtype, w1a.dtype, w2a.dtype)

    use_pallas = force_pallas if force_pallas is not None else (B >= _PALLAS_MIN_BATCH)
    if not use_pallas:
        return _forward_xla(x, w1a, w2a).astype(out_dtype)

    # ---------------------------------------------------------------- Pallas
    # Weights -> f32 scalars in SMEM (scalar prefetch); math in f32.
    w = jnp.stack([w1a.reshape(()), w2a.reshape(())]).astype(jnp.float32)

    # Lane width: shrink for small batches (multiple of 128).
    lanes = max(128, min(lanes, _round_up(pl.cdiv(B, 8), 128)))
    # Pad B only to one sublane group of rows (8 * lanes), NOT to a full tile.
    B_pad = _round_up(B, 8 * lanes)
    R = B_pad // lanes                                   # total rows (mult of 8)

    # Rows per grid step: multiple of 8; split into >= 2 steps when possible so
    # ("parallel",) dimension semantics can shard across v7x's two TensorCores.
    block_rows = max(8, min(block_rows, _round_up(pl.cdiv(R, 2), 8)))
    num_blocks = pl.cdiv(R, block_rows)                  # ragged last block OK

    # Layout plumbing (one fused XLA relayout pass): take the two used columns,
    # put batch on the lane axis, zero-pad the tail, dense (2, R, lanes) slab.
    xt = jnp.transpose(x[:, :2])                         # (2, B)
    xt = jnp.pad(xt, ((0, 0), (0, B_pad - B)))           # (2, B_pad)
    xt = xt.reshape(2, R, lanes)                         # (2, R, lanes)

    out = pl.pallas_call(
        _linear_kernel,
        out_shape=jax.ShapeDtypeStruct((R, lanes), out_dtype),
        grid_spec=pltpu.PrefetchScalarGridSpec(
            num_scalar_prefetch=1,                       # w -> SMEM
            grid=(num_blocks,),
            in_specs=[
                pl.BlockSpec((2, block_rows, lanes), lambda i, w_sref: (0, i, 0)),
            ],
            out_specs=pl.BlockSpec((block_rows, lanes), lambda i, w_sref: (i, 0)),
        ),
        compiler_params=pltpu.CompilerParams(
            dimension_semantics=("parallel",),           # shard steps over TCs
        ),
    )(w, xt)

    # Back to the PyTorch output layout (B, 1); drop the zero padding.
    return out.reshape(-1)[:B].reshape(B, 1)


if __name__ == "__main__":
    key = jax.random.PRNGKey(0)
    kx, kw1, kw2, kx2 = jax.random.split(key, 4)

    # torch.randn(1) stand-ins.
    w1 = jax.random.normal(kw1, (1,), dtype=jnp.float32)
    w2 = jax.random.normal(kw2, (1,), dtype=jnp.float32)

    # 1) Small batch: auto-dispatch takes the fused XLA fast path.
    B, F = 8, 2
    x = jax.random.normal(kx, (B, F), dtype=jnp.float32)
    out = jax.block_until_ready(linear_model(x, w1, w2))
    ref = w1 * x[:, 0].reshape(-1, 1) + w2 * x[:, 1].reshape(-1, 1)
    assert out.shape == (B, 1), out.shape
    assert out.dtype == jnp.float32
    assert jnp.allclose(out, ref, atol=1e-6, rtol=1e-6)

    # 2) Pallas path (forced): F > 2 (extra columns ignored), B not a multiple
    #    of 8*lanes -> exercises padding, a multi-step grid and the ragged
    #    last block (R=24 rows, block_rows=16 -> grid=2, last block clipped).
    B2, F2 = 2085, 4
    x2 = jax.random.normal(kx2, (B2, F2), dtype=jnp.float32)
    out2 = jax.block_until_ready(
        linear_model(x2, w1, w2, block_rows=16, lanes=128, force_pallas=True))
    ref2 = w1 * x2[:, 0].reshape(-1, 1) + w2 * x2[:, 1].reshape(-1, 1)
    assert out2.shape == (B2, 1), out2.shape
    assert jnp.allclose(out2, ref2, atol=1e-6, rtol=1e-6)

    # 3) Pallas path (forced) with default tile parameters (auto lane shrink).
    B3, F3 = 4096, 2
    x3 = jax.random.normal(kx, (B3, F3), dtype=jnp.float32)
    out3 = jax.block_until_ready(linear_model(x3, w1, w2, force_pallas=True))
    ref3 = w1 * x3[:, 0].reshape(-1, 1) + w2 * x3[:, 1].reshape(-1, 1)
    assert out3.shape == (B3, 1), out3.shape
    assert jnp.allclose(out3, ref3, atol=1e-6, rtol=1e-6)

    print("KERNEL_OK")
</pallas_src>

<mosaic_0001>
module attributes {stable_mosaic.version = 11 : i64} {
  func.func @_linear_kernel(%arg0: i32, %arg1: memref<2xf32, #tpu.memory_space<smem>>, %arg2: memref<2x16x128xf32, #tpu.memory_space<vmem>>, %arg3: memref<16x128xf32, #tpu.memory_space<vmem>>) attributes {dimension_semantics = [#tpu.dimension_semantics<parallel>], iteration_bounds = array<i64: 2>, scalar_prefetch = 1 : i64, scratch_operands = 0 : i64, tpu.core_type = #tpu.core_type<tc>, window_params = [{transform_indices = @transform_0, window_bounds = array<i64: 2, 16, 128>}, {transform_indices = @transform_1, window_bounds = array<i64: 16, 128>}]} {
    %c0 = arith.constant 0 : index
    %0 = memref.load %arg1[%c0] : memref<2xf32, #tpu.memory_space<smem>>
    %c1 = arith.constant 1 : index
    %1 = memref.load %arg1[%c1] : memref<2xf32, #tpu.memory_space<smem>>
    %c0_0 = arith.constant 0 : index
    %c0_1 = arith.constant 0 : index
    %c0_2 = arith.constant 0 : index
    %2 = vector.load %arg2[%c0_0, %c0_1, %c0_2] : memref<2x16x128xf32, #tpu.memory_space<vmem>>, vector<1x16x128xf32>
    %3 = vector.shape_cast %2 : vector<1x16x128xf32> to vector<16x128xf32>
    %c1_3 = arith.constant 1 : index
    %c0_4 = arith.constant 0 : index
    %c0_5 = arith.constant 0 : index
    %4 = vector.load %arg2[%c1_3, %c0_4, %c0_5] : memref<2x16x128xf32, #tpu.memory_space<vmem>>, vector<1x16x128xf32>
    %5 = vector.shape_cast %4 : vector<1x16x128xf32> to vector<16x128xf32>
    %6 = vector.broadcast %0 : f32 to vector<16x128xf32>
    %7 = arith.mulf %6, %3 : vector<16x128xf32>
    %8 = vector.broadcast %1 : f32 to vector<16x128xf32>
    %9 = arith.mulf %8, %5 : vector<16x128xf32>
    %10 = arith.addf %7, %9 : vector<16x128xf32>
    %c0_6 = arith.constant 0 : index
    %c0_7 = arith.constant 0 : index
    %11 = vector.load %arg3[%c0_6, %c0_7] : memref<16x128xf32, #tpu.memory_space<vmem>>, vector<16x128xf32>
    tpu.vector_store %arg3[%c0_6, %c0_7], %10 {strides = array<i32>} : memref<16x128xf32, #tpu.memory_space<vmem>>, vector<16x128xf32>,
    return
  }
  func.func @transform_0(%arg0: i32, %arg1: memref<2xf32, #tpu.memory_space<smem>>) -> (i32, i32, i32) {
    %c0_i32 = arith.constant 0 : i32
    %c0_i32_0 = arith.constant 0 : i32
    %c0_i32_1 = arith.constant 0 : i32
    return %c0_i32, %arg0, %c0_i32_0 : i32, i32, i32
  }
  func.func @transform_1(%arg0: i32, %arg1: memref<2xf32, #tpu.memory_space<smem>>) -> (i32, i32) {
    %c0_i32 = arith.constant 0 : i32
    %c0_i32_0 = arith.constant 0 : i32
    return %arg0, %c0_i32 : i32, i32
  }
}

</mosaic_0001>

<llo_original>
// kernel: tpu_custom_call.1
$region0: #{tpu_custom_call.1}
  #allocation0 [shape = 'u32[]', space=smem, size = 0x4, offset = 0x4, fixed_abs, tag = 'smem constant byte address 0x4 - core index']
  #allocation1 [shape = 'u32[144,128]{1,0:T(1,128)}', space=vmem, size = 0x12000, scoped, tag = 'internal scratch']
  #allocation2 [shape = 's32[1]{0}', space=sflag, size = 0x4, scoped, tag = 'scoped memory for tpu_custom_call.1']
  #allocation3 [shape = 'u8[512]{0}', space=smem, size = 0x200, scoped, tag = 'prefetched SMEM operand 0']
  #allocation8 [shape = 's32[]', space=sflag, size = 0x4, offset = 0, fixed_abs, tag = 'sflag constant byte address 0x0 - dummy sync flag']
  %s0 = inlined_call_operand.hbm [shape: f32[2], index: 0, kind: input, shape index: {}]
  %s1 = inlined_call_operand.hbm [shape: f32[2,24,128], index: 1, kind: input, shape index: {}]
  %s2 = inlined_call_operand.hbm [shape: f32[24,128], index: 2, kind: output, shape index: {}]
  %s3 = sld [smem:[#allocation0]]
  $region41: #{tpu_custom_call.1} parent=0
    _
  %s5 = ssub.s32 1, %s3
  %s6 = scalar_select 0, %s5, %s3
  %8 = dma.hbm_to_smem %s0, 16, [#allocation3], [#allocation2]
  %9 = dma.done [#allocation2], 16
  %10 = sfence
  $region1: #{tpu_custom_call.1} parent=0
    #allocation4 [shape = 'u8[32768]{0}', space=vmem, size = 0x8000, scoped, tag = 'input window, operand 1']
    #allocation5 [shape = 's32[2]{0}', space=sflag, size = 0x8, scoped, tag = 'scoped memory for tpu_custom_call.1']
    #allocation6 [shape = 's32[2]{0}', space=sflag, size = 0x8, scoped, tag = 'scoped memory for tpu_custom_call.1']
    #allocation7 [shape = 'u8[16384]{0}', space=vmem, size = 0x4000, scoped, tag = 'output window, operand 0']
    %11 = vsyncpa [#allocation5], 0
    %s12 = scalar_lea.sflag [#allocation5], 1
    %13 = vsyncpa %s12, 0
    %14 = vsyncpa [#allocation6], 0
    %s15 = scalar_lea.sflag [#allocation6], 1
    %16 = vsyncpa %s15, 0
    loop: start=0, step=1, limit=4
    $region2: #{tpu_custom_call.1} parent=1 // loop_pre_header
      _
    $region3: #{tpu_custom_call.1} parent=1 // loop_header
      %s18 = sphi 0, %s22
      %p19 = scmp.ge.s32.totalorder %s18, 4
      %s28 = sphi 0, %s30
      %s31 = sphi 0, %s28
      %s32 = sphi 0, %s31
      %s48 = sphi 0, %s32
      %s54 = sphi 0, %s56
      %s57 = sphi 0, %s54
      %s58 = sphi 0, %s57
      %s74 = sphi 0, %s58
    $region4: #{tpu_custom_call.1} parent=1 // loop_header_branch
      %21 = sbr.rel (%p19) target = $region8
    $region5: #{tpu_custom_call.1} parent=1 // loop_body
      %s23 = ssub.s32 %s18, 1
      %s24 = ssub.s32 %s18, 2
      %s25 = sadd.s32 %s18, 1
      %s26 = ssub.s32 %s18, %s25
      %p27 = scmp.eq.s32.totalorder %s26, 0
      %s29 = sadd.s32 %s28, 1
      %s30 = scalar_select %p27, %s28, %s29
      %p33 = pneg %p27
      %p34 = scmp.eq.s32.totalorder %s18, 1
      %p35 = por %p33, %p34
      %p36 = scmp.ne.s32.totalorder %s28, %s31
      %p37 = scmp.eq.s32.totalorder %s18, 0
      %p38 = por %p36, %p37
      %p39 = scmp.ne.s32.totalorder %s28, %s31
      %p40 = scmp.eq.s32.totalorder %s23, 1
      %p41 = por %p39, %p40
      %p42 = scmp.ne.s32.totalorder %s31, %s32
      %p43 = scmp.eq.s32.totalorder %s23, 0
      %p44 = por %p42, %p43
      %p45 = scmp.ne.s32.totalorder %s31, %s32
      %p46 = scmp.eq.s32.totalorder %s24, 1
      %p47 = por %p45, %p46
      %p49 = scmp.ne.s32.totalorder %s32, %s48
      %p50 = scmp.eq.s32.totalorder %s24, 0
      %p51 = por %p49, %p50
      %s52 = ssub.s32 %s18, %s25
      %p53 = scmp.eq.s32.totalorder %s52, 0
      %s55 = sadd.s32 %s54, 1
      %s56 = scalar_select %p53, %s54, %s55
      %p59 = pneg %p53
      %p60 = scmp.eq.s32.totalorder %s18, 1
      %p61 = por %p59, %p60
      %p62 = scmp.ne.s32.totalorder %s54, %s57
      %p63 = scmp.eq.s32.totalorder %s18, 0
      %p64 = por %p62, %p63
      %p65 = scmp.ne.s32.totalorder %s54, %s57
      %p66 = scmp.eq.s32.totalorder %s23, 1
      %p67 = por %p65, %p66
      %p68 = scmp.ne.s32.totalorder %s57, %s58
      %p69 = scmp.eq.s32.totalorder %s23, 0
      %p70 = por %p68, %p69
      %p71 = scmp.ne.s32.totalorder %s57, %s58
      %p72 = scmp.eq.s32.totalorder %s24, 1
      %p73 = por %p71, %p72
      %p75 = scmp.ne.s32.totalorder %s58, %s74
      %p76 = scmp.eq.s32.totalorder %s24, 0
      %p77 = por %p75, %p76
      %p78 = scmp.le.s32.totalorder 1, %s18
      %p79 = scmp.lt.s32.totalorder %s18, 3
      %p80 = pnand %p78, %p79
      %p81 = pneg %p80
      // Predicated region
      $region9: #{tpu_custom_call.1} parent=5 // pred_check
        _
      $region10: #{tpu_custom_call.1} parent=5 // pred_check_branch
        %83 = sbr.rel (%p80) target = $region12
      $region11: #{tpu_custom_call.1} parent=5 // pred_region
        %s84 = ssub.s32 %s18, 1
      $region12: #{tpu_custom_call.1} parent=5 // pred_fallthru
        _
      %p85 = scmp.lt.s32.totalorder %s18, 2
      // Predicated region
      $region13: #{tpu_custom_call.1} parent=5 // pred_check
        %p86 = pneg %p85
      $region14: #{tpu_custom_call.1} parent=5 // pred_check_branch
        %88 = sbr.rel (%p86) target = $region16
      $region15: #{tpu_custom_call.1} parent=5 // pred_region
        // Predicated region
        $region17: #{tpu_custom_call.1} parent=15 // pred_check
          %p89 = pneg %p38
        $region18: #{tpu_custom_call.1} parent=15 // pred_check_branch
          %91 = sbr.rel (%p89) target = $region20
        $region19: #{tpu_custom_call.1} parent=15 // pred_region
          #allocation9 [shape = 'u32[6]{0}', space=smem, size = 0x18, scoped, tag = 'DMA stride descriptor']
          %s92 = sand.u32 %s28, 1
          %s93 = scalar_lea.sflag [#allocation5], %s92
          %s94 = sand.u32 %s28, 1
          %s95 = smul.addr %s94, 32
          %s96 = scalar_lea.vmem [#allocation4], %s95
          %s97 = smul.u32 2, %s18
          %s98 = ssub.s32 3, %s97
          %p99 = scmp.lt.s32.totalorder %s98, 2
          %s100 = scalar_select %p99, %s98, 2
          %s101 = smul.u32 256, %s100
          %s103 = ssub.s32 512, %s101
          %104 = vsyncadd %s93, %s103
          %p105 = scmp.ne.s32.totalorder 0, %s101
          %s106 = smul.addr %s97, 128
          %s107 = scalar_lea.hbm %s1, %s106
          %s108 = smul.u32 8, %s100
          %s109 = smul.u32 %s108, 2
          %s111 = sshll.u32 1, 14
          %s112 = sxor.u32 4294967295, %s111
          %s114 = sld [smem:[#allocation0]]
          %s115 = sadd.s32 2, %s114
          %s117 = sshll.u32 7, 26
          %s118 = sxor.u32 4294967295, %s117
          %s119 = sand.u32 0, %s118
          %s120 = sshll.u32 %s115, 26
          %s121 = sor.u32 %s119, %s120
          %s122 = sshll.u32 %s96, 4
          %s123 = int_to_ptr.vmem [resolvable:$true] %s122
          %s124 = sshll.u32 %s109, 4
          %129 = sst [smem:[#allocation9]] 384
          %s130 = scalar_lea.smem [#allocation9], 1
          %131 = sst [smem:[%s130]] 256
          %s132 = scalar_lea.smem [#allocation9], 2
          %133 = sst [smem:[%s132]] %s100
          %s134 = scalar_lea.smem [#allocation9], 3
          %135 = sst [smem:[%s134]] 128
          %s136 = scalar_lea.smem [#allocation9], 4
          %137 = sst [smem:[%s136]] 128
          %s138 = scalar_lea.smem [#allocation9], 5
          %139 = sst [smem:[%s138]] 8
          %141 = dma.general (%p105), %s107, %s124, %s123, %s93, [#allocation8], [#allocation9], %s121, 0
        $region20: #{tpu_custom_call.1} parent=15 // pred_fallthru
          _
      $region16: #{tpu_custom_call.1} parent=5 // pred_fallthru
        _
      %p142 = scmp.le.s32.totalorder 1, %s18
      %p143 = scmp.lt.s32.totalorder %s18, 3
      %p144 = pnand %p142, %p143
      %p145 = pneg %p144
      // Predicated region
      $region21: #{tpu_custom_call.1} parent=5 // pred_check
        _
      $region22: #{tpu_custom_call.1} parent=5 // pred_check_branch
        %147 = sbr.rel (%p144) target = $region24
      $region23: #{tpu_custom_call.1} parent=5 // pred_region
        %s148 = ssub.s32 %s18, 1
        %s149 = sand.u32 %s31, 1
        %s150 = scalar_lea.sflag [#allocation5], %s149
        %s151 = sand.u32 %s31, 1
        %s152 = smul.addr %s151, 32
        %s153 = scalar_lea.vmem [#allocation4], %s152
        // Predicated region
        $region25: #{tpu_custom_call.1} parent=23 // pred_check
          %p154 = pneg %p44
        $region26: #{tpu_custom_call.1} parent=23 // pred_check_branch
          %156 = sbr.rel (%p154) target = $region28
        $region27: #{tpu_custom_call.1} parent=23 // pred_region
          %157 = dma.done %s150, 512
        $region28: #{tpu_custom_call.1} parent=23 // pred_fallthru
          _
        %s158 = sand.u32 %s31, 1
        %s159 = scalar_lea.sflag [#allocation5], %s158
        %s160 = sand.u32 %s31, 1
        %s161 = smul.addr %s160, 32
        %s162 = scalar_lea.vmem [#allocation4], %s161
        %p163 = pneg %p44
        %p164 = pneg %p41
        %p165 = pneg %p70
        %p166 = pneg %p67
        %s167 = sand.u32 %s57, 1
        %s168 = scalar_lea.sflag [#allocation6], %s167
        %s169 = sand.u32 %s57, 1
        %s170 = smul.addr %s169, 16
        %s171 = scalar_lea.vmem [#allocation7], %s170
        %s172 = smul.u32 2, %s23
        %s173 = ssub.s32 3, %s172
        %p174 = scmp.lt.s32.totalorder %s173, 2
        %s175 = scalar_select %p174, %s173, 2
        %s176 = smul.u32 256, %s175
        %s177 = smul.u32 2, %s23
        %s178 = ssub.s32 3, %s177
        %p179 = scmp.lt.s32.totalorder %s178, 2
        %s180 = scalar_select %p179, %s178, 2
        %s181 = smul.u32 128, %s180
        %s182 = sld [smem:[#allocation3]]
        %s183 = sld [smem:[#allocation3 + $0x1]]
        %v184 = vld [vmem:[%s153] sm:$0xff]
        %v185 = vld [vmem:[%s153 + $0x8] sm:$0xff]
        %s186 = scalar_lea.vmem %s153, 16 [#allocation4]
        %v187 = vld [vmem:[%s186] sm:$0xff]
        %v188 = vld [vmem:[%s186 + $0x8] sm:$0xff]
        %v189 = vstv %s182
        %v190 = vmul.f32 %v189, %v184
        %v191 = vmul.f32 %v189, %v185
        %v192 = vstv %s183
        %v193 = vmul.f32 %v192, %v187
        %v194 = vmul.f32 %v192, %v188
        %v195 = vadd.f32 %v190, %v193
        %v196 = vadd.f32 %v191, %v194
        %197 = vst [vmem:[%s171] sm:$0xff] %v195
        %198 = vst [vmem:[%s171 + $0x8] sm:$0xff] %v196
        %s199 = sand.u32 %s57, 1
        %s200 = scalar_lea.sflag [#allocation6], %s199
        %s201 = sand.u32 %s57, 1
        %s202 = smul.addr %s201, 16
        %s203 = scalar_lea.vmem [#allocation7], %s202
        // Predicated region
        $region29: #{tpu_custom_call.1} parent=23 // pred_check
          %p204 = pneg %p67
        $region30: #{tpu_custom_call.1} parent=23 // pred_check_branch
          %206 = sbr.rel (%p204) target = $region32
        $region31: #{tpu_custom_call.1} parent=23 // pred_region
          %s207 = smul.u32 2, %s23
          %s208 = ssub.s32 3, %s207
          %p209 = scmp.lt.s32.totalorder %s208, 2
          %s210 = scalar_select %p209, %s208, 2
          %s211 = smul.u32 128, %s210
          %s213 = ssub.s32 256, %s211
          %214 = vsyncadd %s200, %s213
          %p215 = scmp.ne.s32.totalorder 0, %s211
          %s216 = smul.addr %s207, 128
          %s217 = scalar_lea.hbm %s2, %s216
          %s218 = smul.u32 8, %s210
          %s219 = sshll.u32 %s203, 4
          %s220 = int_to_ptr.vmem [resolvable:$true] %s219
          %s221 = sshll.u32 %s218, 4
          %225 = dma.vmem_to_hbm [thread:$0]  (%p215), %s220, %s221, %s217, %s200, 128, 128, 8
        $region32: #{tpu_custom_call.1} parent=23 // pred_fallthru
          _
      $region24: #{tpu_custom_call.1} parent=5 // pred_fallthru
        _
      %p226 = scmp.le.s32.totalorder 2, %s18
      // Predicated region
      $region33: #{tpu_custom_call.1} parent=5 // pred_check
        %p227 = pneg %p226
      $region34: #{tpu_custom_call.1} parent=5 // pred_check_branch
        %229 = sbr.rel (%p227) target = $region36
      $region35: #{tpu_custom_call.1} parent=5 // pred_region
        %s230 = ssub.s32 %s18, 2
        // Predicated region
        $region37: #{tpu_custom_call.1} parent=35 // pred_check
          %p231 = pneg %p73
        $region38: #{tpu_custom_call.1} parent=35 // pred_check_branch
          %233 = sbr.rel (%p231) target = $region40
        $region39: #{tpu_custom_call.1} parent=35 // pred_region
          %s234 = sand.u32 %s58, 1
          %s235 = scalar_lea.sflag [#allocation6], %s234
          %s236 = sand.u32 %s58, 1
          %s237 = smul.addr %s236, 16
          %s238 = scalar_lea.vmem [#allocation7], %s237
          %239 = dma.done %s235, 256
        $region40: #{tpu_custom_call.1} parent=35 // pred_fallthru
          _
      $region36: #{tpu_custom_call.1} parent=5 // pred_fallthru
        _
    $region6: #{tpu_custom_call.1} parent=1 // loop_footer
      %s22 = sadd.s32 1, %s18
    $region7: #{tpu_custom_call.1} parent=1 // loop_footer_branch
      %17 = sbr.rel target = $region3
    $region8: #{tpu_custom_call.1} parent=1 // loop_exit
      _
    %240 = vsyncpa [#allocation5], 1
    %s241 = scalar_lea.sflag [#allocation5], 1
    %242 = vsyncpa %s241, 1
    %243 = vsyncpa [#allocation6], 1
    %s244 = scalar_lea.sflag [#allocation6], 1
    %245 = vsyncpa %s244, 1

</llo_original>
